<compile_context>
chip_gen: v7x
topology: tpu7x:2x2x1
jax: 0.10.0
libtpu: 0.0.40
codegen_flags: <defaults>
</compile_context>

<pallas_src>
import jax
import jax.numpy as jnp
from jax import lax
from jax.experimental import pallas as pl
from jax.experimental.pallas import tpu as pltpu


def _make_kernel(inv_hw: float):
    def kernel(x_ref, w1_ref, b1_ref, w2_ref, b2_ref, idx_ref, out_ref,
               pooled_acc):
        k = pl.program_id(1)

        @pl.when(k == 0)
        def _():
            pooled_acc[...] = jnp.zeros_like(pooled_acc)

        # --- partial spatial sum for this HW chunk (accumulate in f32) ---
        x = x_ref[...].astype(jnp.float32)            # (bn, C, bhw)
        pooled_acc[...] += jnp.sum(x, axis=2)         # (bn, C)

        @pl.when(k == pl.num_programs(1) - 1)
        def _():
            # adaptive_avg_pool2d(., (1,1)) == mean over spatial positions
            pooled = pooled_acc[...] * inv_hw                          # (bn, C)

            # fc[0]: Linear(C -> hidden) + ReLU  (w1 in torch (out, in) layout)
            h = lax.dot_general(pooled, w1_ref[...],
                                (((1,), (1,)), ((), ())),
                                preferred_element_type=jnp.float32) + b1_ref[...]
            h = jnp.maximum(h, 0.0)                                    # (bn, hidden)

            # fc[-1]: Linear(hidden -> heatmap_size)
            logits = lax.dot_general(h, w2_ref[...],
                                     (((1,), (1,)), ((), ())),
                                     preferred_element_type=jnp.float32) + b2_ref[...]

            # soft_argmax_1d: softmax over heatmap axis, weighted sum w/ arange
            m = jnp.max(logits, axis=1, keepdims=True)
            e = jnp.exp(logits - m)
            denom = jnp.sum(e, axis=1, keepdims=True)
            probs = e * pl.reciprocal(denom, approx=True)              # EUP slot
            coord = lax.dot_general(probs, idx_ref[...],
                                    (((1,), (1,)), ((), ())),
                                    preferred_element_type=jnp.float32)  # (bn, 1)

            # lane-dense store; wrapper slices column 0
            out_ref[...] = jnp.broadcast_to(coord, out_ref.shape)

    return kernel


def _pick_hw_tile(hw, bn, c, itemsize, budget_bytes=4 << 20):
    """Largest multiple of 128 dividing HW with block <= budget; else full HW."""
    if hw % 128 != 0:
        return hw                      # lane rule: must be full extent
    best = 128
    cand = 128
    while cand <= hw:
        if hw % cand == 0 and bn * c * cand * itemsize <= budget_bytes:
            best = cand
        cand += 128
    return best


def heatmap1d_head(x_nchw, w1, b1, w2, b2):
    """x_nchw: (N, C, H, W) f32/bf16; w*: torch Linear layout. Returns (N, 1) f32."""
    N, C, H, W = x_nchw.shape
    HW = H * W
    hidden = w1.shape[0]
    K = w2.shape[0]

    # Free view (no data movement): NCHW -> (N, C, HW).
    x = x_nchw.reshape(N, C, HW)

    # Batch tile: full N when small, otherwise 8-row tiles (pad N if ragged).
    if N <= 8:
        bn, n_pad = N, N
    else:
        bn = 8
        n_pad = ((N + bn - 1) // bn) * bn
    if n_pad != N:
        x = jnp.pad(x, ((0, n_pad - N), (0, 0), (0, 0)))

    itemsize = x.dtype.itemsize
    bhw = _pick_hw_tile(HW, bn, C, itemsize)
    grid = (n_pad // bn, HW // bhw)

    w1f = w1.astype(jnp.float32)
    w2f = w2.astype(jnp.float32)
    b1_2d = b1.reshape(1, hidden).astype(jnp.float32)
    b2_2d = b2.reshape(1, K).astype(jnp.float32)
    idx = jnp.arange(K, dtype=jnp.float32).reshape(1, K)

    const = lambda i, k: (0, 0)        # weights resident: DMA'd once
    grid_spec = pltpu.PrefetchScalarGridSpec(
        num_scalar_prefetch=0,
        grid=grid,
        in_specs=[
            pl.BlockSpec((bn, C, bhw), lambda i, k: (i, 0, k)),   # x stream
            pl.BlockSpec((hidden, C), const),                     # w1
            pl.BlockSpec((1, hidden), const),                     # b1
            pl.BlockSpec((K, hidden), const),                     # w2
            pl.BlockSpec((1, K), const),                          # b2
            pl.BlockSpec((1, K), const),                          # arange(K)
        ],
        out_specs=pl.BlockSpec((bn, 128), lambda i, k: (i, 0)),
        scratch_shapes=[pltpu.VMEM((bn, C), jnp.float32)],
    )

    cost = pl.CostEstimate(
        flops=int(2 * n_pad * C * HW + 2 * n_pad * (C * hidden + hidden * K + K)),
        transcendentals=int(n_pad * K),
        bytes_accessed=int(n_pad * C * HW * itemsize
                           + (w1f.size + b1_2d.size + w2f.size + b2_2d.size
                              + idx.size) * 4
                           + n_pad * 128 * 4),
    )

    out = pl.pallas_call(
        _make_kernel(1.0 / float(HW)),
        out_shape=jax.ShapeDtypeStruct((n_pad, 128), jnp.float32),
        grid_spec=grid_spec,
        compiler_params=pltpu.CompilerParams(
            dimension_semantics=("parallel", "arbitrary"),   # batch across TCs (v7x)
            vmem_limit_bytes=32 * 1024 * 1024,               # explicit, v7x-safe
        ),
        cost_estimate=cost,
    )(x, w1f, b1_2d, w2f, b2_2d, idx)

    return out[:N, :1]


def reference(x_nchw, w1, b1, w2, b2, heatmap_size):
    """Pure-JAX mirror of the PyTorch module."""
    pooled = jnp.mean(x_nchw, axis=(2, 3))                 # (N, C)
    h = jnp.maximum(pooled @ w1.T + b1, 0.0)               # (N, hidden)
    logits = h @ w2.T + b2                                 # (N, K)
    p = jax.nn.softmax(logits, axis=1)
    coord = jnp.sum(p * jnp.arange(heatmap_size, dtype=p.dtype)[None, :], axis=1)
    return coord.reshape(-1, 1)


if __name__ == "__main__":
    # Small shapes consistent with the module's forward.
    N, C, H, W = 2, 4, 16, 16
    hidden_dim = 32
    heatmap_size = 64

    key = jax.random.PRNGKey(0)
    kx, kw1, kw2 = jax.random.split(key, 3)

    x = jax.random.normal(kx, (N, C, H, W), dtype=jnp.float32)

    # Deterministic init matching init_weights(): normal(std=0.01), bias=0.
    w1 = 0.01 * jax.random.normal(kw1, (hidden_dim, C), dtype=jnp.float32)       # (out, in)
    b1 = jnp.zeros((hidden_dim,), dtype=jnp.float32)
    w2 = 0.01 * jax.random.normal(kw2, (heatmap_size, hidden_dim), dtype=jnp.float32)
    b2 = jnp.zeros((heatmap_size,), dtype=jnp.float32)

    out = heatmap1d_head(x, w1, b1, w2, b2)
    out = jax.block_until_ready(out)

    ref = reference(x, w1, b1, w2, b2, heatmap_size)
    assert out.shape == (N, 1), out.shape
    # Tolerance allows the EUP approximate-reciprocal softmax denominator
    # (coord magnitude ~heatmap_size/2); use approx=False for bitwise-tight parity.
    assert jnp.allclose(out, ref, atol=1e-2, rtol=1e-2), (out, ref)

    print("KERNEL_OK")
</pallas_src>

<mosaic_0001>
module attributes {stable_mosaic.version = 11 : i64} {
  func.func @kernel(%arg0: i32, %arg1: i32, %arg2: memref<2x4x256xf32, #tpu.memory_space<vmem>>, %arg3: memref<32x4xf32, #tpu.memory_space<vmem>>, %arg4: memref<1x32xf32, #tpu.memory_space<vmem>>, %arg5: memref<64x32xf32, #tpu.memory_space<vmem>>, %arg6: memref<1x64xf32, #tpu.memory_space<vmem>>, %arg7: memref<1x64xf32, #tpu.memory_space<vmem>>, %arg8: memref<2x128xf32, #tpu.memory_space<vmem>>, %arg9: memref<2x4xf32, #tpu.memory_space<vmem>>) attributes {dimension_semantics = [#tpu.dimension_semantics<parallel>, #tpu.dimension_semantics<arbitrary>], iteration_bounds = array<i64: 1, 1>, scalar_prefetch = 0 : i64, scratch_operands = 1 : i64, tpu.core_type = #tpu.core_type<tc>, window_params = [{transform_indices = @transform_0, window_bounds = array<i64: 2, 4, 256>}, {pipeline_mode = #tpu.pipeline_mode<synchronous>, transform_indices = @transform_1, window_bounds = array<i64: 32, 4>}, {pipeline_mode = #tpu.pipeline_mode<synchronous>, transform_indices = @transform_2, window_bounds = array<i64: 1, 32>}, {pipeline_mode = #tpu.pipeline_mode<synchronous>, transform_indices = @transform_3, window_bounds = array<i64: 64, 32>}, {pipeline_mode = #tpu.pipeline_mode<synchronous>, transform_indices = @transform_4, window_bounds = array<i64: 1, 64>}, {pipeline_mode = #tpu.pipeline_mode<synchronous>, transform_indices = @transform_5, window_bounds = array<i64: 1, 64>}, {transform_indices = @transform_6, window_bounds = array<i64: 2, 128>}]} {
    %c0_i32 = arith.constant 0 : i32
    %0 = arith.cmpi eq, %arg1, %c0_i32 : i32
    %1 = arith.extui %0 : i1 to i32
    %c0_i32_0 = arith.constant 0 : i32
    %2 = arith.cmpi ne, %1, %c0_i32_0 : i32
    scf.if %2 {
      %cst_9 = arith.constant 0.000000e+00 : f32
      %11 = vector.broadcast %cst_9 : f32 to vector<2x4xf32>
      %c0_10 = arith.constant 0 : index
      %c0_11 = arith.constant 0 : index
      %12 = vector.load %arg9[%c0_10, %c0_11] : memref<2x4xf32, #tpu.memory_space<vmem>>, vector<2x4xf32>
      tpu.vector_store %arg9[%c0_10, %c0_11], %11 {strides = array<i32>} : memref<2x4xf32, #tpu.memory_space<vmem>>, vector<2x4xf32>,
    } else {
    }
    %c0 = arith.constant 0 : index
    %c0_1 = arith.constant 0 : index
    %c0_2 = arith.constant 0 : index
    %3 = vector.load %arg2[%c0, %c0_1, %c0_2] : memref<2x4x256xf32, #tpu.memory_space<vmem>>, vector<2x4x256xf32>
    %c0_3 = arith.constant 0 : index
    %c0_4 = arith.constant 0 : index
    %4 = vector.load %arg9[%c0_3, %c0_4] : memref<2x4xf32, #tpu.memory_space<vmem>>, vector<2x4xf32>
    %cst = arith.constant dense<0.000000e+00> : vector<2x4xf32>
    %5 = vector.multi_reduction <add>, %3, %cst [2] : vector<2x4x256xf32> to vector<2x4xf32>
    %6 = arith.addf %4, %5 : vector<2x4xf32>
    %c0_5 = arith.constant 0 : index
    %c0_6 = arith.constant 0 : index
    %7 = vector.load %arg9[%c0_5, %c0_6] : memref<2x4xf32, #tpu.memory_space<vmem>>, vector<2x4xf32>
    tpu.vector_store %arg9[%c0_5, %c0_6], %6 {strides = array<i32>} : memref<2x4xf32, #tpu.memory_space<vmem>>, vector<2x4xf32>,
    %c0_i32_7 = arith.constant 0 : i32
    %8 = arith.cmpi eq, %arg1, %c0_i32_7 : i32
    %9 = arith.extui %8 : i1 to i32
    %c0_i32_8 = arith.constant 0 : i32
    %10 = arith.cmpi ne, %9, %c0_i32_8 : i32
    scf.if %10 {
      %c0_9 = arith.constant 0 : index
      %c0_10 = arith.constant 0 : index
      %11 = vector.load %arg9[%c0_9, %c0_10] : memref<2x4xf32, #tpu.memory_space<vmem>>, vector<2x4xf32>
      %cst_11 = arith.constant 3.906250e-03 : f32
      %12 = vector.broadcast %cst_11 : f32 to vector<2x4xf32>
      %13 = arith.mulf %11, %12 : vector<2x4xf32>
      %c0_12 = arith.constant 0 : index
      %c0_13 = arith.constant 0 : index
      %14 = vector.load %arg3[%c0_12, %c0_13] : memref<32x4xf32, #tpu.memory_space<vmem>>, vector<32x4xf32>
      %cst_14 = arith.constant dense<0.000000e+00> : vector<2x32xf32>
      %15 = tpu.matmul %13, %14, %cst_14 {dimension_numbers = #tpu.dot_dimension_numbers<[1], [1], [0], [0], [0, 0, 1, 0], [], []>} : vector<2x4xf32>, vector<32x4xf32>, vector<2x32xf32> -> vector<2x32xf32>
      %c0_15 = arith.constant 0 : index
      %c0_16 = arith.constant 0 : index
      %16 = vector.load %arg4[%c0_15, %c0_16] : memref<1x32xf32, #tpu.memory_space<vmem>>, vector<1x32xf32>
      %17 = vector.broadcast %16 : vector<1x32xf32> to vector<2x32xf32>
      %18 = arith.addf %15, %17 : vector<2x32xf32>
      %cst_17 = arith.constant 0.000000e+00 : f32
      %19 = vector.broadcast %cst_17 : f32 to vector<2x32xf32>
      %20 = arith.maximumf %18, %19 : vector<2x32xf32>
      %c0_18 = arith.constant 0 : index
      %c0_19 = arith.constant 0 : index
      %21 = vector.load %arg5[%c0_18, %c0_19] : memref<64x32xf32, #tpu.memory_space<vmem>>, vector<64x32xf32>
      %cst_20 = arith.constant dense<0.000000e+00> : vector<2x64xf32>
      %22 = tpu.matmul %20, %21, %cst_20 {dimension_numbers = #tpu.dot_dimension_numbers<[1], [1], [0], [0], [0, 0, 1, 0], [], []>} : vector<2x32xf32>, vector<64x32xf32>, vector<2x64xf32> -> vector<2x64xf32>
      %c0_21 = arith.constant 0 : index
      %c0_22 = arith.constant 0 : index
      %23 = vector.load %arg6[%c0_21, %c0_22] : memref<1x64xf32, #tpu.memory_space<vmem>>, vector<1x64xf32>
      %24 = vector.broadcast %23 : vector<1x64xf32> to vector<2x64xf32>
      %25 = arith.addf %22, %24 : vector<2x64xf32>
      %cst_23 = arith.constant dense<0xFF800000> : vector<2xf32>
      %26 = vector.multi_reduction <maximumf>, %25, %cst_23 [1] : vector<2x64xf32> to vector<2xf32>
      %27 = vector.shape_cast %26 : vector<2xf32> to vector<2x1xf32>
      %28 = vector.broadcast %27 : vector<2x1xf32> to vector<2x64xf32>
      %29 = arith.subf %25, %28 : vector<2x64xf32>
      %30 = math.exp %29 : vector<2x64xf32>
      %cst_24 = arith.constant dense<0.000000e+00> : vector<2xf32>
      %31 = vector.multi_reduction <add>, %30, %cst_24 [1] : vector<2x64xf32> to vector<2xf32>
      %32 = vector.shape_cast %31 : vector<2xf32> to vector<2x1xf32>
      %33 = tpu.reciprocal %32 {approx = true} : vector<2x1xf32> -> vector<2x1xf32>
      %34 = vector.broadcast %33 : vector<2x1xf32> to vector<2x64xf32>
      %35 = arith.mulf %30, %34 : vector<2x64xf32>
      %c0_25 = arith.constant 0 : index
      %c0_26 = arith.constant 0 : index
      %36 = vector.load %arg7[%c0_25, %c0_26] : memref<1x64xf32, #tpu.memory_space<vmem>>, vector<1x64xf32>
      %cst_27 = arith.constant dense<0.000000e+00> : vector<2x1xf32>
      %37 = tpu.matmul %35, %36, %cst_27 {dimension_numbers = #tpu.dot_dimension_numbers<[1], [1], [0], [0], [0, 0, 1, 0], [], []>} : vector<2x64xf32>, vector<1x64xf32>, vector<2x1xf32> -> vector<2x1xf32>
      %38 = vector.shape_cast %37 : vector<2x1xf32> to vector<2x1xf32>
      %39 = vector.broadcast %38 : vector<2x1xf32> to vector<2x128xf32>
      %c0_28 = arith.constant 0 : index
      %c0_29 = arith.constant 0 : index
      %40 = vector.load %arg8[%c0_28, %c0_29] : memref<2x128xf32, #tpu.memory_space<vmem>>, vector<2x128xf32>
      tpu.vector_store %arg8[%c0_28, %c0_29], %39 {strides = array<i32>} : memref<2x128xf32, #tpu.memory_space<vmem>>, vector<2x128xf32>,
    } else {
    }
    return
  }
  func.func @transform_0(%arg0: i32, %arg1: i32) -> (i32, i32, i32) {
    %c0_i32 = arith.constant 0 : i32
    %c0_i32_0 = arith.constant 0 : i32
    return %arg0, %c0_i32, %arg1 : i32, i32, i32
  }
  func.func @transform_1(%arg0: i32, %arg1: i32) -> (i32, i32) {
    %c0_i32 = arith.constant 0 : i32
    %c0_i32_0 = arith.constant 0 : i32
    %c0_i32_1 = arith.constant 0 : i32
    return %c0_i32, %c0_i32_0 : i32, i32
  }
  func.func @transform_2(%arg0: i32, %arg1: i32) -> (i32, i32) {
    %c0_i32 = arith.constant 0 : i32
    %c0_i32_0 = arith.constant 0 : i32
    %c0_i32_1 = arith.constant 0 : i32
    return %c0_i32, %c0_i32_0 : i32, i32
  }
  func.func @transform_3(%arg0: i32, %arg1: i32) -> (i32, i32) {
    %c0_i32 = arith.constant 0 : i32
    %c0_i32_0 = arith.constant 0 : i32
    %c0_i32_1 = arith.constant 0 : i32
    return %c0_i32, %c0_i32_0 : i32, i32
  }
  func.func @transform_4(%arg0: i32, %arg1: i32) -> (i32, i32) {
    %c0_i32 = arith.constant 0 : i32
    %c0_i32_0 = arith.constant 0 : i32
    %c0_i32_1 = arith.constant 0 : i32
    return %c0_i32, %c0_i32_0 : i32, i32
  }
  func.func @transform_5(%arg0: i32, %arg1: i32) -> (i32, i32) {
    %c0_i32 = arith.constant 0 : i32
    %c0_i32_0 = arith.constant 0 : i32
    %c0_i32_1 = arith.constant 0 : i32
    return %c0_i32, %c0_i32_0 : i32, i32
  }
  func.func @transform_6(%arg0: i32, %arg1: i32) -> (i32, i32) {
    %c0_i32 = arith.constant 0 : i32
    %c0_i32_0 = arith.constant 0 : i32
    return %arg0, %c0_i32 : i32, i32
  }
}

</mosaic_0001>

<llo_original>
// kernel: tpu_custom_call.1
$region0: #{tpu_custom_call.1}
  #allocation0 [shape = 'u32[]', space=smem, size = 0x4, offset = 0x4, fixed_abs, tag = 'smem constant byte address 0x4 - core index']
  #allocation1 [shape = 'u32[144,128]{1,0:T(1,128)}', space=vmem, size = 0x12000, scoped, tag = 'internal scratch']
  #allocation2 [shape = 'f32[2,4]{1,0:T(2,128)}', space=vmem, size = 0x400, scoped, tag = 'scratch operand']
  %s0 = inlined_call_operand.vmem [shape: f32[2,4,256], index: 0, kind: input, shape index: {}]
  %s1 = inlined_call_operand.vmem [shape: f32[32,4], index: 1, kind: input, shape index: {}]
  %s2 = inlined_call_operand.vmem [shape: f32[1,32], index: 2, kind: input, shape index: {}]
  %s3 = inlined_call_operand.vmem [shape: f32[64,32], index: 3, kind: input, shape index: {}]
  %s4 = inlined_call_operand.vmem [shape: f32[1,64], index: 4, kind: input, shape index: {}]
  %s5 = inlined_call_operand.vmem [shape: f32[1,64], index: 5, kind: input, shape index: {}]
  %s6 = inlined_call_operand.hbm [shape: f32[2,128], index: 6, kind: output, shape index: {}]
  %s7 = sld [smem:[#allocation0]]
  $region42: #{tpu_custom_call.1} parent=0
    _
  %s9 = ssub.s32 1, %s7
  %s10 = scalar_select 0, %s9, %s7
  $region1: #{tpu_custom_call.1} parent=0
    #allocation3 [shape = 'u8[1024]{0}', space=vmem, size = 0x400, scoped, tag = 'output window, operand 0, single buffered']
    #allocation4 [shape = 's32[1]{0}', space=sflag, size = 0x4, scoped, tag = 'scoped memory for tpu_custom_call.1']
    %11 = vsyncpa [#allocation4], 0
    // Predicated region
    $region2: #{tpu_custom_call.1} parent=1 // pred_check
      _
    $region3: #{tpu_custom_call.1} parent=1 // pred_check_branch
      %13 = sbr.rel (0) target = $region5
    $region4: #{tpu_custom_call.1} parent=1 // pred_region
      _
    $region5: #{tpu_custom_call.1} parent=1 // pred_fallthru
      _
    // Predicated region
    $region6: #{tpu_custom_call.1} parent=1 // pred_check
      _
    $region7: #{tpu_custom_call.1} parent=1 // pred_check_branch
      %15 = sbr.rel (0) target = $region9
    $region8: #{tpu_custom_call.1} parent=1 // pred_region
      _
    $region9: #{tpu_custom_call.1} parent=1 // pred_fallthru
      _
    // Predicated region
    $region10: #{tpu_custom_call.1} parent=1 // pred_check
      _
    $region11: #{tpu_custom_call.1} parent=1 // pred_check_branch
      %17 = sbr.rel (0) target = $region13
    $region12: #{tpu_custom_call.1} parent=1 // pred_region
      _
    $region13: #{tpu_custom_call.1} parent=1 // pred_fallthru
      _
    // Predicated region
    $region14: #{tpu_custom_call.1} parent=1 // pred_check
      _
    $region15: #{tpu_custom_call.1} parent=1 // pred_check_branch
      %19 = sbr.rel (0) target = $region17
    $region16: #{tpu_custom_call.1} parent=1 // pred_region
      _
    $region17: #{tpu_custom_call.1} parent=1 // pred_fallthru
      _
    // Predicated region
    $region18: #{tpu_custom_call.1} parent=1 // pred_check
      _
    $region19: #{tpu_custom_call.1} parent=1 // pred_check_branch
      %21 = sbr.rel (0) target = $region21
    $region20: #{tpu_custom_call.1} parent=1 // pred_region
      _
    $region21: #{tpu_custom_call.1} parent=1 // pred_fallthru
      _
    // Predicated region
    $region22: #{tpu_custom_call.1} parent=1 // pred_check
      _
    $region23: #{tpu_custom_call.1} parent=1 // pred_check_branch
      %23 = sbr.rel (0) target = $region25
    $region24: #{tpu_custom_call.1} parent=1 // pred_region
      _
    $region25: #{tpu_custom_call.1} parent=1 // pred_fallthru
      _
    %p24 = scmp.eq.s32.totalorder 0, 0
    // Predicated region
    $region26: #{tpu_custom_call.1} parent=1 // pred_check
      %p25 = pneg %p24
    $region27: #{tpu_custom_call.1} parent=1 // pred_check_branch
      %27 = sbr.rel (%p25) target = $region29
    $region28: #{tpu_custom_call.1} parent=1 // pred_region
      %vm28 = vcmask 25600
      %29 = vst.msk [vmem:[#allocation2] sm:$0x3] %vm28, 0.0
    $region29: #{tpu_custom_call.1} parent=1 // pred_fallthru
      _
    %v30 = vld [vmem:[%s0] sm:$0xff]
    %v31 = vld [vmem:[%s0 + $0x8] sm:$0xff]
    %v32 = vld [vmem:[#allocation2] sm:$0x3]
    %v35 = vcombine.high %v30, %v30
    %v36 = vcombine.high %v31, %v31
    %vm39 = vcmask 1043456
    %v40 = vsel %vm39, %v30, 0.0
    %v41 = vsel %vm39, %v35, 0.0
    %v42 = vadd.f32 %v40, %v41
    %43 = vadd.xlane.f32.xlu0 %v42
    %v44 = vpop.xlane.xlu0 %43
    %v45 = vsel %vm39, %v31, 0.0
    %v46 = vsel %vm39, %v36, 0.0
    %v47 = vadd.f32 %v45, %v46
    %48 = vadd.xlane.f32.xlu0 %v47
    %v49 = vpop.xlane.xlu0 %48
    %v52 = vlaneseq
    %v53 = vand.u32 %v52, 127
    %v54 = vlaneseq
    %v55 = vshrl.u32 %v54, 7
    %v56 = vsub.s32 %v53, %v55
    %v57 = vrot.slane %v44, %v56
    %v58 = vlaneseq
    %v59 = vshrl.u32 %v58, 7
    %v60 = vsub.s32 %v53, %v59
    %v61 = vrot.slane %v49, %v60
    %vm62 = vcmask 1041409
    %v63 = vsel %vm62, %v61, %v57
    %v65 = vadd.f32 %v32, %v63
    %vm66 = vcmask 25600
    %67 = vst.msk [vmem:[#allocation2] sm:$0x3] %vm66, %v65
    // Predicated region
    $region30: #{tpu_custom_call.1} parent=1 // pred_check
      %p68 = pneg %p24
    $region31: #{tpu_custom_call.1} parent=1 // pred_check_branch
      %70 = sbr.rel (%p68) target = $region33
    $region32: #{tpu_custom_call.1} parent=1 // pred_region
      %v71 = vld [vmem:[#allocation2] sm:$0x3]
      %v72 = vmul.f32 %v71, 0.00390625
      %v73 = vld [vmem:[%s1] sm:$0xff]
      %v74 = vld [vmem:[%s1 + $0x8] sm:$0xff]
      %v75 = vld [vmem:[%s1 + $0x10] sm:$0xff]
      %v76 = vld [vmem:[%s1 + $0x18] sm:$0xff]
      %v77 = vld [vmem:[%s2] sm:$0x1]
      %v79 = vlaneseq
      %v80 = vshrl.u32 %v79, 7
      %v81 = vsub.s32 0, %v80
      %v82 = vrot.slane %v77, %v81
      %vm84 = vcmask 31744
      %v86 = vsel %vm84, %v72, 0
      %v89 = vsel %vm84, %v73, 0
      %v92 = vsel %vm84, %v74, 0
      %v95 = vsel %vm84, %v75, 0
      %v98 = vsel %vm84, %v76, 0
      %100 = vmatprep.subr.mxu0 0.0
      %101 = vmatpush1.xpose.msra.mxu0 %v89
      %102 = vmatprep.subr.mxu0 0.0
      %103 = vmatpush1.xpose.msra.mxu0 %v92
      %104 = vmatprep.subr.mxu0 0.0
      %105 = vmatpush1.xpose.msra.mxu0 %v95
      %106 = vmatprep.subr.mxu0 0.0
      %107 = vmatpush1.xpose.msra.mxu0 %v98
      %108 = vmatprep.subr.mxu0 0.0
      %109 = vmatpush1.xpose.msra.mxu0 0.0
      %110 = vmatprep.subr.mxu0 0.0
      %111 = vmatpush1.xpose.msra.mxu0 0.0
      %112 = vmatprep.subr.mxu0 0.0
      %113 = vmatpush1.xpose.msra.mxu0 0.0
      %114 = vmatprep.subr.mxu0 0.0
      %115 = vmatpush1.xpose.msra.mxu0 0.0
      %116 = vmatprep.subr.mxu0 0.0
      %117 = vmatpush1.xpose.msra.mxu0 0.0
      %118 = vmatprep.subr.mxu0 0.0
      %119 = vmatpush1.xpose.msra.mxu0 0.0
      %120 = vmatprep.subr.mxu0 0.0
      %121 = vmatpush1.xpose.msra.mxu0 0.0
      %122 = vmatprep.subr.mxu0 0.0
      %123 = vmatpush1.xpose.msra.mxu0 0.0
      %124 = vmatprep.subr.mxu0 0.0
      %125 = vmatpush1.xpose.msra.mxu0 0.0
      %126 = vmatprep.subr.mxu0 0.0
      %127 = vmatpush1.xpose.msra.mxu0 0.0
      %128 = vmatprep.subr.mxu0 0.0
      %129 = vmatpush1.xpose.msra.mxu0 0.0
      %130 = vmatprep.subr.mxu0 0.0
      %131 = vmatpush1.xpose.msra.mxu0 0.0
      %132 = vmatprep.subr.mxu0 0.0
      %133 = vmatpush1.xpose.msra.mxu0 0.0
      %134 = vmatprep.subr.mxu0 0.0
      %135 = vmatpush1.xpose.msra.mxu0 0.0
      %136 = vmatprep.subr.mxu0 0.0
      %137 = vmatpush1.xpose.msra.mxu0 0.0
      %138 = vmatprep.subr.mxu0 0.0
      %139 = vmatpush1.xpose.msra.mxu0 0.0
      %140 = vmatprep.subr.mxu0 0.0
      %141 = vmatpush1.xpose.msra.mxu0 0.0
      %142 = vmatprep.subr.mxu0 0.0
      %143 = vmatpush1.xpose.msra.mxu0 0.0
      %144 = vmatprep.subr.mxu0 0.0
      %145 = vmatpush1.xpose.msra.mxu0 0.0
      %146 = vmatprep.subr.mxu0 0.0
      %147 = vmatpush1.xpose.msra.mxu0 0.0
      %148 = vmatprep.subr.mxu0 0.0
      %149 = vmatpush1.xpose.msra.mxu0 0.0
      %150 = vmatprep.subr.mxu0 0.0
      %151 = vmatpush1.xpose.msra.mxu0 0.0
      %152 = vmatprep.subr.mxu0 0.0
      %153 = vmatpush1.xpose.msra.mxu0 0.0
      %154 = vmatprep.subr.mxu0 0.0
      %155 = vmatpush1.xpose.msra.mxu0 0.0
      %156 = vmatprep.subr.mxu0 0.0
      %157 = vmatpush1.xpose.msra.mxu0 0.0
      %158 = vmatprep.subr.mxu0 0.0
      %159 = vmatpush1.xpose.msra.mxu0 0.0
      %160 = vmatprep.subr.mxu0 0.0
      %161 = vmatpush1.xpose.msra.mxu0 0.0
      %162 = vmatprep.subr.mxu0 0.0
      %163 = vmatpush1.xpose.msra.mxu0 0.0
      %164 = vmatprep.mubr.f32.mxu0 0.0
      %165 = vmatmul.mubr.f32.gmra.mrb[0].mxu0 %v86
      %v166 = vpop.f32.mrb[0].mxu0
      %v167 = vadd.f32 %v82, %v166
      %v168 = vpop.f32.mrb[0].mxu0
      %169 = vdwg.mxu0
      %v170 = vmax.f32 %v167, 0.0
      %v171 = vld [vmem:[%s3] sm:$0xff]
      %v172 = vld [vmem:[%s3 + $0x8] sm:$0xff]
      %v173 = vld [vmem:[%s3 + $0x10] sm:$0xff]
      %v174 = vld [vmem:[%s3 + $0x18] sm:$0xff]
      %v175 = vld [vmem:[%s3 + $0x20] sm:$0xff]
      %v176 = vld [vmem:[%s3 + $0x28] sm:$0xff]
      %v177 = vld [vmem:[%s3 + $0x30] sm:$0xff]
      %v178 = vld [vmem:[%s3 + $0x38] sm:$0xff]
      %v179 = vld [vmem:[%s4] sm:$0x1]
      %v181 = vlaneseq
      %v182 = vshrl.u32 %v181, 7
      %v183 = vsub.s32 0, %v182
      %v184 = vrot.slane %v179, %v183
      %vm186 = vcmask 261120
      %v188 = vsel %vm186, %v170, 0
      %v191 = vsel %vm186, %v171, 0
      %v194 = vsel %vm186, %v172, 0
      %v197 = vsel %vm186, %v173, 0
      %v200 = vsel %vm186, %v174, 0
      %v203 = vsel %vm186, %v175, 0
      %v206 = vsel %vm186, %v176, 0
      %v209 = vsel %vm186, %v177, 0
      %v212 = vsel %vm186, %v178, 0
      %214 = vmatprep.subr.mxu0 0.0
      %215 = vmatpush1.xpose.msra.mxu0 %v191
      %216 = vmatprep.subr.mxu0 0.0
      %217 = vmatpush1.xpose.msra.mxu0 %v194
      %218 = vmatprep.subr.mxu0 0.0
      %219 = vmatpush1.xpose.msra.mxu0 %v197
      %220 = vmatprep.subr.mxu0 0.0
      %221 = vmatpush1.xpose.msra.mxu0 %v200
      %222 = vmatprep.subr.mxu0 0.0
      %223 = vmatpush1.xpose.msra.mxu0 %v203
      %224 = vmatprep.subr.mxu0 0.0
      %225 = vmatpush1.xpose.msra.mxu0 %v206
      %226 = vmatprep.subr.mxu0 0.0
      %227 = vmatpush1.xpose.msra.mxu0 %v209
      %228 = vmatprep.subr.mxu0 0.0
      %229 = vmatpush1.xpose.msra.mxu0 %v212
      %230 = vmatprep.subr.mxu0 0.0
      %231 = vmatpush1.xpose.msra.mxu0 0.0
      %232 = vmatprep.subr.mxu0 0.0
      %233 = vmatpush1.xpose.msra.mxu0 0.0
      %234 = vmatprep.subr.mxu0 0.0
      %235 = vmatpush1.xpose.msra.mxu0 0.0
      %236 = vmatprep.subr.mxu0 0.0
      %237 = vmatpush1.xpose.msra.mxu0 0.0
      %238 = vmatprep.subr.mxu0 0.0
      %239 = vmatpush1.xpose.msra.mxu0 0.0
      %240 = vmatprep.subr.mxu0 0.0
      %241 = vmatpush1.xpose.msra.mxu0 0.0
      %242 = vmatprep.subr.mxu0 0.0
      %243 = vmatpush1.xpose.msra.mxu0 0.0
      %244 = vmatprep.subr.mxu0 0.0
      %245 = vmatpush1.xpose.msra.mxu0 0.0
      %246 = vmatprep.subr.mxu0 0.0
      %247 = vmatpush1.xpose.msra.mxu0 0.0
      %248 = vmatprep.subr.mxu0 0.0
      %249 = vmatpush1.xpose.msra.mxu0 0.0
      %250 = vmatprep.subr.mxu0 0.0
      %251 = vmatpush1.xpose.msra.mxu0 0.0
      %252 = vmatprep.subr.mxu0 0.0
      %253 = vmatpush1.xpose.msra.mxu0 0.0
      %254 = vmatprep.subr.mxu0 0.0
      %255 = vmatpush1.xpose.msra.mxu0 0.0
      %256 = vmatprep.subr.mxu0 0.0
      %257 = vmatpush1.xpose.msra.mxu0 0.0
      %258 = vmatprep.subr.mxu0 0.0
      %259 = vmatpush1.xpose.msra.mxu0 0.0
      %260 = vmatprep.subr.mxu0 0.0
      %261 = vmatpush1.xpose.msra.mxu0 0.0
      %262 = vmatprep.subr.mxu0 0.0
      %263 = vmatpush1.xpose.msra.mxu0 0.0
      %264 = vmatprep.subr.mxu0 0.0
      %265 = vmatpush1.xpose.msra.mxu0 0.0
      %266 = vmatprep.subr.mxu0 0.0
      %267 = vmatpush1.xpose.msra.mxu0 0.0
      %268 = vmatprep.subr.mxu0 0.0
      %269 = vmatpush1.xpose.msra.mxu0 0.0
      %270 = vmatprep.subr.mxu0 0.0
      %271 = vmatpush1.xpose.msra.mxu0 0.0
      %272 = vmatprep.subr.mxu0 0.0
      %273 = vmatpush1.xpose.msra.mxu0 0.0
      %274 = vmatprep.subr.mxu0 0.0
      %275 = vmatpush1.xpose.msra.mxu0 0.0
      %276 = vmatprep.subr.mxu0 0.0
      %277 = vmatpush1.xpose.msra.mxu0 0.0
      %278 = vmatprep.mubr.f32.mxu0 0.0
      %279 = vmatmul.mubr.f32.gmra.mrb[0].mxu0 %v188
      %v280 = vpop.f32.mrb[0].mxu0
      %v281 = vadd.f32 %v184, %v280
      %v282 = vpop.f32.mrb[0].mxu0
      %283 = vdwg.mxu0
      %vm284 = vcmask 517120
      %v285 = vsel %vm284, %v281, -inf
      %286 = vmax.xlane.f32.xlu0 %v285
      %v287 = vpop.xlane.xlu0 %286
      %v288 = vsub.f32 %v281, %v287
      %v289 = vmul.f32 %v288, 1.442695
      %v290 = vpow.pop %v289
      %v291 = vsel %vm284, %v290, 0.0
      %292 = vadd.xlane.f32.xlu0 %v291
      %v293 = vpop.xlane.xlu0 %292
      %v294 = vrcp.pop %v293
      %v295 = vmul.f32 %v290, %v294
      %v296 = vld [vmem:[%s5] sm:$0x1]
      %v298 = vlaneseq
      %v299 = vshrl.u32 %v298, 7
      %v300 = vsub.s32 0, %v299
      %v301 = vrot.slane %v296, %v300
      %v303 = vmul.f32 %v295, %v301
      %v304 = vsel %vm284, %v303, 0.0
      %305 = vadd.xlane.f32.xlu0 %v304
      %v306 = vpop.xlane.xlu0 %305
      %307 = vst [vmem:[#allocation3] sm:$0x3] %v306
    $region33: #{tpu_custom_call.1} parent=1 // pred_fallthru
      _
    // Predicated region
    $region34: #{tpu_custom_call.1} parent=1 // pred_check
      _
    $region35: #{tpu_custom_call.1} parent=1 // pred_check_branch
      %309 = sbr.rel (0) target = $region37
    $region36: #{tpu_custom_call.1} parent=1 // pred_region
      %s311 = ssub.s32 32, 32
      %312 = vsyncadd [#allocation4], %s311
      %s314 = sshll.u32 [#allocation3], 4
      %s315 = int_to_ptr.vmem [resolvable:$true] %s314
      %317 = dma.vmem_to_hbm [thread:$0]  %s315, 32, %s6, [#allocation4]
    $region37: #{tpu_custom_call.1} parent=1 // pred_fallthru
      _
    // Predicated region
    $region38: #{tpu_custom_call.1} parent=1 // pred_check
      _
    $region39: #{tpu_custom_call.1} parent=1 // pred_check_branch
      %319 = sbr.rel (0) target = $region41
    $region40: #{tpu_custom_call.1} parent=1 // pred_region
      %320 = dma.done [#allocation4], 32
    $region41: #{tpu_custom_call.1} parent=1 // pred_fallthru
      _
    %321 = vsyncpa [#allocation4], 1

</llo_original>
